<compile_context>
chip_gen: v7x
topology: tpu7x:2x2x1
jax: 0.10.0
libtpu: 0.0.40
codegen_flags: <defaults>
</compile_context>

<pallas_src>
import functools

import jax
import jax.numpy as jnp
import numpy as np
from jax.experimental import pallas as pl
from jax.experimental.pallas import tpu as pltpu

_MAX_BATCH_PER_BLOCK = 8          # cap on the static unroll inside the kernel
_TARGET_BLOCK_BYTES = 6 << 20     # ~6 MiB/block: 2x(in+out) double-buffered < 32 MiB VMEM


def _eeg_depth_attention_kernel(b_ref, band_ref, x_ref, o_ref, *, c_scale):
    # b_ref:    SMEM (1,)        conv bias (scalar prefetch)
    # band_ref: VMEM (D, D, 1)   banded conv matrix (weights laid out along D)
    # x_ref:    VMEM (Nb, D, H, W)
    # o_ref:    VMEM (Nb, D, H, W)
    nb = x_ref.shape[0]
    band = band_ref[...].astype(jnp.float32)           # (D, D, 1)
    bias = b_ref[0]

    for n in range(nb):                                 # static unroll, nb <= 8
        xn = x_ref[n].astype(jnp.float32)               # (D, H, W)

        # adaptive avg pool to (1, W): mean over the EEG-channel axis H
        pooled = jnp.mean(xn, axis=1)                   # (D, W)

        # depth conv along D as a banded contraction (exact f32, no pad/concat):
        #   y[d, w] = bias + sum_m band[d, m] * pooled[m, w]
        y = jnp.sum(band * pooled[None, :, :], axis=1) + bias     # (D, W)

        # softmax over D with the C_eeg scale folded into the (1, W) normalizer
        m = jnp.max(y, axis=0, keepdims=True)           # (1, W)
        e = jnp.exp(y - m)                              # (D, W)
        denom = jnp.sum(e, axis=0, keepdims=True)       # (1, W)
        # NOTE: approx=True (EUP slot) would be free but adds ~1e-4 rel error;
        # keep the exact reciprocal to stay inside the 1e-5 test tolerance.
        scale = jnp.float32(c_scale) * pl.reciprocal(denom, approx=False)  # (1, W)
        att = e * scale                                 # (D, W), C-scale applied here

        # out = att * x broadcast over H; single fused multiply/cast/store
        o_ref[n] = (att[:, None, :] * xn).astype(o_ref.dtype)


def _choose_batch_per_block(n, per_elem_bytes):
    """Largest divisor Nb of n with Nb*per_elem <= target, Nb <= cap, and (when
    n >= 2) at least 2 grid steps so both v7x TensorCores stay busy."""
    best = 1
    for cand in range(1, min(n, _MAX_BATCH_PER_BLOCK) + 1):
        if n % cand:
            continue
        if cand > 1 and cand * per_elem_bytes > _TARGET_BLOCK_BYTES:
            continue
        if n >= 2 and n // cand < 2:
            continue
        best = cand
    return best


def eeg_depth_attention(x, weight, bias, *, k):
    """x: (N, D, H, W). weight: (k,) conv kernel along D. bias: (1,)."""
    N, D, H, W = x.shape
    p = k // 2

    # Banded conv matrix: band[d, m] = weight[m - d + p] if 0 <= m - d + p < k else 0.
    d_idx = jnp.arange(D)
    off = d_idx[None, :] - d_idx[:, None] + p                      # (D, D)
    band = jnp.where((off >= 0) & (off < k),
                     weight[jnp.clip(off, 0, k - 1)],
                     jnp.float32(0.0)).astype(jnp.float32)[:, :, None]   # (D, D, 1)

    # Keep the lane (W) dimension a multiple of 128 so output stores are lane-dense.
    w_pad = ((W + 127) // 128) * 128
    x_in = x if w_pad == W else jnp.pad(x, ((0, 0), (0, 0), (0, 0), (0, w_pad - W)))

    per_elem_bytes = D * H * w_pad * x.dtype.itemsize
    nb = _choose_batch_per_block(N, per_elem_bytes)
    grid = (N // nb,)

    kernel = functools.partial(_eeg_depth_attention_kernel, c_scale=float(H))
    out = pl.pallas_call(
        kernel,
        out_shape=jax.ShapeDtypeStruct((N, D, H, w_pad), x.dtype),
        grid_spec=pltpu.PrefetchScalarGridSpec(
            num_scalar_prefetch=1,                      # bias -> SMEM
            grid=grid,
            in_specs=[
                pl.BlockSpec((D, D, 1), lambda n, b: (0, 0, 0)),             # band
                pl.BlockSpec((nb, D, H, w_pad), lambda n, b: (n, 0, 0, 0)),  # x
            ],
            out_specs=pl.BlockSpec((nb, D, H, w_pad), lambda n, b: (n, 0, 0, 0)),
        ),
        compiler_params=pltpu.CompilerParams(
            dimension_semantics=("parallel",),
            vmem_limit_bytes=32 * 1024 * 1024,
        ),
    )(bias, band, x_in)
    return out if w_pad == W else out[..., :W]


def eeg_depth_attention_ref(x, weight, bias, *, k):
    """Pure-JAX reference matching the PyTorch forward exactly."""
    N, D, H, W = x.shape
    pooled = jnp.mean(x, axis=2, keepdims=True)                 # (N, D, 1, W)
    xt = jnp.transpose(pooled, (0, 2, 1, 3))                    # (N, 1, D, W)
    y = jax.lax.conv_general_dilated(
        xt, weight.reshape(1, 1, k, 1), window_strides=(1, 1),
        padding=((k // 2, k // 2), (0, 0)),
        dimension_numbers=("NCHW", "OIHW", "NCHW")) + bias[0]
    y = jax.nn.softmax(y, axis=-2)                              # softmax over D
    y = jnp.transpose(y, (0, 2, 1, 3))                          # (N, D, 1, W)
    return y * float(H) * x


if __name__ == "__main__":
    # Small shapes: N=2 batch, D=4 "depth" feature maps, C_eeg=H=16 channels, W=128 samples.
    N, D, H, W = 2, 4, 16, 128
    K = 7

    key = jax.random.PRNGKey(0)
    kx, kw, kb = jax.random.split(key, 3)
    x = jax.random.normal(kx, (N, D, H, W), dtype=jnp.float32)

    # Deterministic Conv2d(1,1,(k,1)) params (PyTorch shapes: weight (1,1,k,1), bias (1,)).
    bound = 1.0 / np.sqrt(K)
    weight = jax.random.uniform(kw, (K,), jnp.float32, -bound, bound)
    bias = jax.random.uniform(kb, (1,), jnp.float32, -bound, bound)

    out = eeg_depth_attention(x, weight, bias, k=K)
    out = jax.block_until_ready(out)

    ref = eeg_depth_attention_ref(x, weight, bias, k=K)
    np.testing.assert_allclose(np.asarray(out), np.asarray(ref), rtol=1e-5, atol=1e-5)

    print("KERNEL_OK")
</pallas_src>

<mosaic_0001>
module attributes {stable_mosaic.version = 11 : i64} {
  func.func @_eeg_depth_attention_kernel(%arg0: i32, %arg1: memref<1xf32, #tpu.memory_space<smem>>, %arg2: memref<4x4x1xf32, #tpu.memory_space<vmem>>, %arg3: memref<1x4x16x128xf32, #tpu.memory_space<vmem>>, %arg4: memref<1x4x16x128xf32, #tpu.memory_space<vmem>>) attributes {dimension_semantics = [#tpu.dimension_semantics<parallel>], iteration_bounds = array<i64: 2>, scalar_prefetch = 1 : i64, scratch_operands = 0 : i64, tpu.core_type = #tpu.core_type<tc>, window_params = [{pipeline_mode = #tpu.pipeline_mode<synchronous>, transform_indices = @transform_0, window_bounds = array<i64: 4, 4, 1>}, {transform_indices = @transform_1, window_bounds = array<i64: 1, 4, 16, 128>}, {transform_indices = @transform_2, window_bounds = array<i64: 1, 4, 16, 128>}]} {
    %c0 = arith.constant 0 : index
    %c0_0 = arith.constant 0 : index
    %c0_1 = arith.constant 0 : index
    %0 = vector.load %arg2[%c0, %c0_0, %c0_1] : memref<4x4x1xf32, #tpu.memory_space<vmem>>, vector<4x4x1xf32>
    %c0_2 = arith.constant 0 : index
    %1 = memref.load %arg1[%c0_2] : memref<1xf32, #tpu.memory_space<smem>>
    %c0_3 = arith.constant 0 : index
    %c0_4 = arith.constant 0 : index
    %c0_5 = arith.constant 0 : index
    %c0_6 = arith.constant 0 : index
    %2 = vector.load %arg3[%c0_3, %c0_4, %c0_5, %c0_6] : memref<1x4x16x128xf32, #tpu.memory_space<vmem>>, vector<1x4x16x128xf32>
    %3 = vector.shape_cast %2 : vector<1x4x16x128xf32> to vector<4x16x128xf32>
    %cst = arith.constant dense<0.000000e+00> : vector<4x128xf32>
    %4 = vector.multi_reduction <add>, %3, %cst [1] : vector<4x16x128xf32> to vector<4x128xf32>
    %cst_7 = arith.constant 1.600000e+01 : f32
    %5 = vector.broadcast %cst_7 : f32 to vector<4x128xf32>
    %6 = arith.divf %4, %5 : vector<4x128xf32>
    %7 = vector.shape_cast %6 : vector<4x128xf32> to vector<1x4x128xf32>
    %8 = vector.broadcast %0 : vector<4x4x1xf32> to vector<4x4x128xf32>
    %9 = vector.broadcast %7 : vector<1x4x128xf32> to vector<4x4x128xf32>
    %10 = arith.mulf %8, %9 : vector<4x4x128xf32>
    %cst_8 = arith.constant dense<0.000000e+00> : vector<4x128xf32>
    %11 = vector.multi_reduction <add>, %10, %cst_8 [1] : vector<4x4x128xf32> to vector<4x128xf32>
    %12 = vector.broadcast %1 : f32 to vector<4x128xf32>
    %13 = arith.addf %11, %12 : vector<4x128xf32>
    %cst_9 = arith.constant dense<0xFF800000> : vector<128xf32>
    %14 = vector.multi_reduction <maximumf>, %13, %cst_9 [0] : vector<4x128xf32> to vector<128xf32>
    %15 = vector.shape_cast %14 : vector<128xf32> to vector<1x128xf32>
    %16 = vector.broadcast %15 : vector<1x128xf32> to vector<4x128xf32>
    %17 = arith.subf %13, %16 : vector<4x128xf32>
    %18 = math.exp %17 : vector<4x128xf32>
    %cst_10 = arith.constant dense<0.000000e+00> : vector<128xf32>
    %19 = vector.multi_reduction <add>, %18, %cst_10 [0] : vector<4x128xf32> to vector<128xf32>
    %20 = vector.shape_cast %19 : vector<128xf32> to vector<1x128xf32>
    %21 = tpu.reciprocal %20 : vector<1x128xf32> -> vector<1x128xf32>
    %cst_11 = arith.constant 1.600000e+01 : f32
    %22 = vector.broadcast %cst_11 : f32 to vector<1x128xf32>
    %23 = arith.mulf %22, %21 : vector<1x128xf32>
    %24 = vector.broadcast %23 : vector<1x128xf32> to vector<4x128xf32>
    %25 = arith.mulf %18, %24 : vector<4x128xf32>
    %26 = vector.shape_cast %25 : vector<4x128xf32> to vector<4x1x128xf32>
    %27 = vector.broadcast %26 : vector<4x1x128xf32> to vector<4x16x128xf32>
    %28 = arith.mulf %27, %3 : vector<4x16x128xf32>
    %c0_12 = arith.constant 0 : index
    %c0_13 = arith.constant 0 : index
    %c0_14 = arith.constant 0 : index
    %c0_15 = arith.constant 0 : index
    %29 = vector.load %arg4[%c0_12, %c0_13, %c0_14, %c0_15] : memref<1x4x16x128xf32, #tpu.memory_space<vmem>>, vector<1x4x16x128xf32>
    %30 = vector.shape_cast %29 : vector<1x4x16x128xf32> to vector<4x16x128xf32>
    %31 = vector.shape_cast %28 : vector<4x16x128xf32> to vector<1x4x16x128xf32>
    tpu.vector_store %arg4[%c0_12, %c0_13, %c0_14, %c0_15], %31 {strides = array<i32>} : memref<1x4x16x128xf32, #tpu.memory_space<vmem>>, vector<1x4x16x128xf32>,
    return
  }
  func.func @transform_0(%arg0: i32, %arg1: memref<1xf32, #tpu.memory_space<smem>>) -> (i32, i32, i32) {
    %c0_i32 = arith.constant 0 : i32
    %c0_i32_0 = arith.constant 0 : i32
    %c0_i32_1 = arith.constant 0 : i32
    %c0_i32_2 = arith.constant 0 : i32
    return %c0_i32, %c0_i32_0, %c0_i32_1 : i32, i32, i32
  }
  func.func @transform_1(%arg0: i32, %arg1: memref<1xf32, #tpu.memory_space<smem>>) -> (i32, i32, i32, i32) {
    %c0_i32 = arith.constant 0 : i32
    %c0_i32_0 = arith.constant 0 : i32
    %c0_i32_1 = arith.constant 0 : i32
    %c0_i32_2 = arith.constant 0 : i32
    return %arg0, %c0_i32, %c0_i32_0, %c0_i32_1 : i32, i32, i32, i32
  }
  func.func @transform_2(%arg0: i32, %arg1: memref<1xf32, #tpu.memory_space<smem>>) -> (i32, i32, i32, i32) {
    %c0_i32 = arith.constant 0 : i32
    %c0_i32_0 = arith.constant 0 : i32
    %c0_i32_1 = arith.constant 0 : i32
    %c0_i32_2 = arith.constant 0 : i32
    return %arg0, %c0_i32, %c0_i32_0, %c0_i32_1 : i32, i32, i32, i32
  }
}

</mosaic_0001>

<llo_original>
// kernel: tpu_custom_call.1
$region0: #{tpu_custom_call.1}
  #allocation0 [shape = 'u32[]', space=smem, size = 0x4, offset = 0x4, fixed_abs, tag = 'smem constant byte address 0x4 - core index']
  #allocation1 [shape = 'u32[144,128]{1,0:T(1,128)}', space=vmem, size = 0x12000, scoped, tag = 'internal scratch']
  #allocation2 [shape = 's32[1]{0}', space=sflag, size = 0x4, scoped, tag = 'scoped memory for tpu_custom_call.1']
  #allocation3 [shape = 'f32[1]{0:T(128)S(6)}', space=smem, size = 0x200, scoped, tag = 'prefetched SMEM operand 0']
  %s0 = inlined_call_operand.<no memory space> [shape: f32[1], index: 0, kind: input, shape index: {}]
  %s1 = inlined_call_operand.vmem [shape: f32[4,4,1], index: 1, kind: input, shape index: {}]
  %s2 = inlined_call_operand.hbm [shape: f32[2,4,16,128], index: 2, kind: input, shape index: {}]
  %s3 = inlined_call_operand.hbm [shape: f32[2,4,16,128], index: 3, kind: output, shape index: {}]
  %s4 = sld [smem:[#allocation0]]
  $region45: #{tpu_custom_call.1} parent=0
    _
  %s6 = ssub.s32 1, %s4
  %s7 = scalar_select 0, %s6, %s4
  %8 = sst [smem:[#allocation3]] %s0
  $region1: #{tpu_custom_call.1} parent=0
    #allocation4 [shape = 'u8[65536]{0}', space=vmem, size = 0x10000, scoped, tag = 'input window, operand 2']
    #allocation5 [shape = 's32[2]{0}', space=sflag, size = 0x8, scoped, tag = 'scoped memory for tpu_custom_call.1']
    #allocation6 [shape = 's32[2]{0}', space=sflag, size = 0x8, scoped, tag = 'scoped memory for tpu_custom_call.1']
    #allocation7 [shape = 'u8[65536]{0}', space=vmem, size = 0x10000, scoped, tag = 'output window, operand 0']
    %9 = vsyncpa [#allocation5], 0
    %s10 = scalar_lea.sflag [#allocation5], 1
    %11 = vsyncpa %s10, 0
    %12 = vsyncpa [#allocation6], 0
    %s13 = scalar_lea.sflag [#allocation6], 1
    %14 = vsyncpa %s13, 0
    loop: start=0, step=1, limit=4
    $region2: #{tpu_custom_call.1} parent=1 // loop_pre_header
      _
    $region3: #{tpu_custom_call.1} parent=1 // loop_header
      %s16 = sphi 0, %s20
      %p17 = scmp.ge.s32.totalorder %s16, 4
      %s24 = sphi 0, %s24
      %s26 = sphi 0, %s24
      %s27 = sphi 0, %s26
      %s41 = sphi 0, %s27
      %s47 = sphi 0, %s49
      %s50 = sphi 0, %s47
      %s51 = sphi 0, %s50
      %s67 = sphi 0, %s51
      %s73 = sphi 0, %s75
      %s76 = sphi 0, %s73
      %s77 = sphi 0, %s76
      %s93 = sphi 0, %s77
    $region4: #{tpu_custom_call.1} parent=1 // loop_header_branch
      %19 = sbr.rel (%p17) target = $region8
    $region5: #{tpu_custom_call.1} parent=1 // loop_body
      %s21 = ssub.s32 %s16, 1
      %s22 = ssub.s32 %s16, 2
      %s23 = sadd.s32 %s16, 1
      %s25 = sadd.s32 %s24, 1
      %p28 = scmp.eq.s32.totalorder %s16, 1
      %p29 = scmp.ne.s32.totalorder %s24, %s26
      %p30 = scmp.eq.s32.totalorder %s16, 0
      %p31 = por %p29, %p30
      %p32 = scmp.ne.s32.totalorder %s24, %s26
      %p33 = scmp.eq.s32.totalorder %s21, 1
      %p34 = por %p32, %p33
      %p35 = scmp.ne.s32.totalorder %s26, %s27
      %p36 = scmp.eq.s32.totalorder %s21, 0
      %p37 = por %p35, %p36
      %p38 = scmp.ne.s32.totalorder %s26, %s27
      %p39 = scmp.eq.s32.totalorder %s22, 1
      %p40 = por %p38, %p39
      %p42 = scmp.ne.s32.totalorder %s27, %s41
      %p43 = scmp.eq.s32.totalorder %s22, 0
      %p44 = por %p42, %p43
      %s45 = ssub.s32 %s16, %s23
      %p46 = scmp.eq.s32.totalorder %s45, 0
      %s48 = sadd.s32 %s47, 1
      %s49 = scalar_select %p46, %s47, %s48
      %p52 = pneg %p46
      %p53 = scmp.eq.s32.totalorder %s16, 1
      %p54 = por %p52, %p53
      %p55 = scmp.ne.s32.totalorder %s47, %s50
      %p56 = scmp.eq.s32.totalorder %s16, 0
      %p57 = por %p55, %p56
      %p58 = scmp.ne.s32.totalorder %s47, %s50
      %p59 = scmp.eq.s32.totalorder %s21, 1
      %p60 = por %p58, %p59
      %p61 = scmp.ne.s32.totalorder %s50, %s51
      %p62 = scmp.eq.s32.totalorder %s21, 0
      %p63 = por %p61, %p62
      %p64 = scmp.ne.s32.totalorder %s50, %s51
      %p65 = scmp.eq.s32.totalorder %s22, 1
      %p66 = por %p64, %p65
      %p68 = scmp.ne.s32.totalorder %s51, %s67
      %p69 = scmp.eq.s32.totalorder %s22, 0
      %p70 = por %p68, %p69
      %s71 = ssub.s32 %s16, %s23
      %p72 = scmp.eq.s32.totalorder %s71, 0
      %s74 = sadd.s32 %s73, 1
      %s75 = scalar_select %p72, %s73, %s74
      %p78 = pneg %p72
      %p79 = scmp.eq.s32.totalorder %s16, 1
      %p80 = por %p78, %p79
      %p81 = scmp.ne.s32.totalorder %s73, %s76
      %p82 = scmp.eq.s32.totalorder %s16, 0
      %p83 = por %p81, %p82
      %p84 = scmp.ne.s32.totalorder %s73, %s76
      %p85 = scmp.eq.s32.totalorder %s21, 1
      %p86 = por %p84, %p85
      %p87 = scmp.ne.s32.totalorder %s76, %s77
      %p88 = scmp.eq.s32.totalorder %s21, 0
      %p89 = por %p87, %p88
      %p90 = scmp.ne.s32.totalorder %s76, %s77
      %p91 = scmp.eq.s32.totalorder %s22, 1
      %p92 = por %p90, %p91
      %p94 = scmp.ne.s32.totalorder %s77, %s93
      %p95 = scmp.eq.s32.totalorder %s22, 0
      %p96 = por %p94, %p95
      %p97 = scmp.le.s32.totalorder 1, %s16
      %p98 = scmp.lt.s32.totalorder %s16, 3
      %p99 = pnand %p97, %p98
      %p100 = pneg %p99
      // Predicated region
      $region9: #{tpu_custom_call.1} parent=5 // pred_check
        _
      $region10: #{tpu_custom_call.1} parent=5 // pred_check_branch
        %102 = sbr.rel (%p99) target = $region12
      $region11: #{tpu_custom_call.1} parent=5 // pred_region
        %s103 = ssub.s32 %s16, 1
        // Predicated region
        $region13: #{tpu_custom_call.1} parent=11 // pred_check
          %p104 = pneg %p37
        $region14: #{tpu_custom_call.1} parent=11 // pred_check_branch
          %106 = sbr.rel (%p104) target = $region16
        $region15: #{tpu_custom_call.1} parent=11 // pred_region
          _
        $region16: #{tpu_custom_call.1} parent=11 // pred_fallthru
          _
      $region12: #{tpu_custom_call.1} parent=5 // pred_fallthru
        _
      %p107 = scmp.lt.s32.totalorder %s16, 2
      // Predicated region
      $region17: #{tpu_custom_call.1} parent=5 // pred_check
        %p108 = pneg %p107
      $region18: #{tpu_custom_call.1} parent=5 // pred_check_branch
        %110 = sbr.rel (%p108) target = $region20
      $region19: #{tpu_custom_call.1} parent=5 // pred_region
        // Predicated region
        $region21: #{tpu_custom_call.1} parent=19 // pred_check
          %p111 = pneg %p57
        $region22: #{tpu_custom_call.1} parent=19 // pred_check_branch
          %113 = sbr.rel (%p111) target = $region24
        $region23: #{tpu_custom_call.1} parent=19 // pred_region
          %s114 = sand.u32 %s47, 1
          %s115 = scalar_lea.sflag [#allocation5], %s114
          %s116 = sand.u32 %s47, 1
          %s117 = smul.addr %s116, 64
          %s118 = scalar_lea.vmem [#allocation4], %s117
          %s120 = ssub.s32 1024, 1024
          %121 = vsyncadd %s115, %s120
          %s122 = smul.addr %s16, 8
          %s123 = smul.addr %s122, 128
          %s124 = scalar_lea.hbm %s2, %s123
          %s125 = sshll.u32 %s118, 4
          %s126 = int_to_ptr.vmem [resolvable:$true] %s125
          %131 = dma.hbm_to_vmem [thread:$0]  %s124, 1024, %s126, %s115, 128, 128, 8
        $region24: #{tpu_custom_call.1} parent=19 // pred_fallthru
          _
      $region20: #{tpu_custom_call.1} parent=5 // pred_fallthru
        _
      %p132 = scmp.le.s32.totalorder 1, %s16
      %p133 = scmp.lt.s32.totalorder %s16, 3
      %p134 = pnand %p132, %p133
      %p135 = pneg %p134
      // Predicated region
      $region25: #{tpu_custom_call.1} parent=5 // pred_check
        _
      $region26: #{tpu_custom_call.1} parent=5 // pred_check_branch
        %137 = sbr.rel (%p134) target = $region28
      $region27: #{tpu_custom_call.1} parent=5 // pred_region
        %s138 = ssub.s32 %s16, 1
        %s139 = sand.u32 %s50, 1
        %s140 = scalar_lea.sflag [#allocation5], %s139
        %s141 = sand.u32 %s50, 1
        %s142 = smul.addr %s141, 64
        %s143 = scalar_lea.vmem [#allocation4], %s142
        // Predicated region
        $region29: #{tpu_custom_call.1} parent=27 // pred_check
          %p144 = pneg %p63
        $region30: #{tpu_custom_call.1} parent=27 // pred_check_branch
          %146 = sbr.rel (%p144) target = $region32
        $region31: #{tpu_custom_call.1} parent=27 // pred_region
          %147 = dma.done %s140, 1024
        $region32: #{tpu_custom_call.1} parent=27 // pred_fallthru
          _
        %p148 = pneg %p37
        %p149 = pneg %p34
        %s150 = sand.u32 %s50, 1
        %s151 = scalar_lea.sflag [#allocation5], %s150
        %s152 = sand.u32 %s50, 1
        %s153 = smul.addr %s152, 64
        %s154 = scalar_lea.vmem [#allocation4], %s153
        %p155 = pneg %p63
        %p156 = pneg %p60
        %p157 = pneg %p89
        %p158 = pneg %p86
        %s159 = sand.u32 %s76, 1
        %s160 = scalar_lea.sflag [#allocation6], %s159
        %s161 = sand.u32 %s76, 1
        %s162 = smul.addr %s161, 64
        %s163 = scalar_lea.vmem [#allocation7], %s162
        %v164 = vld [vmem:[%s1] sm:$0xf]
        %v165 = vld [vmem:[%s1 + $0x4] sm:$0xf]
        %v166 = vld [vmem:[%s1 + $0x8] sm:$0xf]
        %v167 = vld [vmem:[%s1 + $0xc] sm:$0xf]
        %s168 = sld [smem:[#allocation3]]
        %v169 = vld [vmem:[%s143] sm:$0xff]
        %v170 = vld [vmem:[%s143 + $0x8] sm:$0xff]
        %v171 = vld [vmem:[%s143 + $0x10] sm:$0xff]
        %v172 = vld [vmem:[%s143 + $0x18] sm:$0xff]
        %v173 = vld [vmem:[%s143 + $0x20] sm:$0xff]
        %v174 = vld [vmem:[%s143 + $0x28] sm:$0xff]
        %v175 = vld [vmem:[%s143 + $0x30] sm:$0xff]
        %v176 = vld [vmem:[%s143 + $0x38] sm:$0xff]
        %v177 = vadd.f32 %v169, %v170
        %v178 = vrot.slane %v177, 4
        %v179 = vadd.f32 %v177, %v178
        %v180 = vrot.slane %v179, 2
        %v181 = vadd.f32 %v179, %v180
        %v182 = vrot.slane %v181, 1
        %v183 = vadd.f32 %v181, %v182
        %v184 = vadd.f32 %v171, %v172
        %v185 = vrot.slane %v184, 4
        %v186 = vadd.f32 %v184, %v185
        %v187 = vrot.slane %v186, 2
        %v188 = vadd.f32 %v186, %v187
        %v189 = vrot.slane %v188, 1
        %v190 = vadd.f32 %v188, %v189
        %v191 = vadd.f32 %v173, %v174
        %v192 = vrot.slane %v191, 4
        %v193 = vadd.f32 %v191, %v192
        %v194 = vrot.slane %v193, 2
        %v195 = vadd.f32 %v193, %v194
        %v196 = vrot.slane %v195, 1
        %v197 = vadd.f32 %v195, %v196
        %v198 = vadd.f32 %v175, %v176
        %v199 = vrot.slane %v198, 4
        %v200 = vadd.f32 %v198, %v199
        %v201 = vrot.slane %v200, 2
        %v202 = vadd.f32 %v200, %v201
        %v203 = vrot.slane %v202, 1
        %v204 = vadd.f32 %v202, %v203
        %v205 = vrcp.pop 16.0
        %v206 = vmul.f32 %v183, %v205
        %v207 = vmul.f32 %v190, %v205
        %v208 = vmul.f32 %v197, %v205
        %v209 = vmul.f32 %v204, %v205
        %211 = vset.pattern.permute.xlu0 0
        %212 = vperm.xlu0 %211, %v164
        %v213 = vpop.permute.xlu0 %212
        %216 = vset.pattern.permute.xlu0 0
        %217 = vperm.xlu0 %216, %v165
        %v218 = vpop.permute.xlu0 %217
        %221 = vset.pattern.permute.xlu0 0
        %222 = vperm.xlu0 %221, %v166
        %v223 = vpop.permute.xlu0 %222
        %226 = vset.pattern.permute.xlu0 0
        %227 = vperm.xlu0 %226, %v167
        %v228 = vpop.permute.xlu0 %227
        %vm234 = vcmask 1041409
        %v235 = vsel %vm234, %v207, %v206
        %vm236 = vcmask 1042434
        %v237 = vsel %vm236, %v208, %v235
        %vm238 = vcmask 1043459
        %v239 = vsel %vm238, %v209, %v237
        %v241 = vmul.f32 %v213, %v239
        %v242 = vmul.f32 %v218, %v239
        %v243 = vmul.f32 %v223, %v239
        %v244 = vmul.f32 %v228, %v239
        %vm245 = vcmask 1043456
        %v246 = vsel %vm245, %v241, 0.0
        %v247 = vrot.slane %v246, 4
        %v248 = vadd.f32 %v246, %v247
        %v249 = vrot.slane %v248, 2
        %v250 = vadd.f32 %v248, %v249
        %v251 = vrot.slane %v250, 1
        %v252 = vadd.f32 %v250, %v251
        %v253 = vsel %vm245, %v242, 0.0
        %v254 = vrot.slane %v253, 4
        %v255 = vadd.f32 %v253, %v254
        %v256 = vrot.slane %v255, 2
        %v257 = vadd.f32 %v255, %v256
        %v258 = vrot.slane %v257, 1
        %v259 = vadd.f32 %v257, %v258
        %v260 = vsel %vm245, %v243, 0.0
        %v261 = vrot.slane %v260, 4
        %v262 = vadd.f32 %v260, %v261
        %v263 = vrot.slane %v262, 2
        %v264 = vadd.f32 %v262, %v263
        %v265 = vrot.slane %v264, 1
        %v266 = vadd.f32 %v264, %v265
        %v267 = vsel %vm245, %v244, 0.0
        %v268 = vrot.slane %v267, 4
        %v269 = vadd.f32 %v267, %v268
        %v270 = vrot.slane %v269, 2
        %v271 = vadd.f32 %v269, %v270
        %v272 = vrot.slane %v271, 1
        %v273 = vadd.f32 %v271, %v272
        %v274 = vstv %s168
        %v275 = vadd.f32 %v252, %v274
        %v276 = vadd.f32 %v259, %v274
        %v277 = vadd.f32 %v266, %v274
        %v278 = vadd.f32 %v273, %v274
        %v279 = vmax.f32 %v275, %v276
        %v280 = vmax.f32 %v277, %v278
        %v281 = vmax.f32 %v279, %v280
        %v282 = vsub.f32 %v275, %v281
        %v283 = vsub.f32 %v276, %v281
        %v284 = vsub.f32 %v277, %v281
        %v285 = vsub.f32 %v278, %v281
        %v286 = vmul.f32 %v282, 1.442695
        %v287 = vpow.pop %v286
        %v288 = vmul.f32 %v283, 1.442695
        %v289 = vpow.pop %v288
        %v290 = vmul.f32 %v284, 1.442695
        %v291 = vpow.pop %v290
        %v292 = vmul.f32 %v285, 1.442695
        %v293 = vpow.pop %v292
        %v298 = vrot.slane %v289, 7
        %v299 = vsel %vm234, %v298, %v287
        %v300 = vrot.slane %v291, 6
        %v301 = vsel %vm236, %v300, %v299
        %v302 = vrot.slane %v293, 5
        %v303 = vsel %vm238, %v302, %v301
        %v305 = vsel %vm245, %v303, 0.0
        %v306 = vrot.slane %v305, 4
        %v307 = vadd.f32 %v305, %v306
        %v308 = vrot.slane %v307, 2
        %v309 = vadd.f32 %v307, %v308
        %v310 = vrot.slane %v309, 1
        %v311 = vadd.f32 %v309, %v310
        %v312 = vrcp.pop %v311
        %v313 = vmul.f32 %v312, 16.0
        %v314 = vlaneseq
        %v315 = vshrl.u32 %v314, 7
        %v316 = vsub.s32 0, %v315
        %v317 = vrot.slane %v313, %v316
        %v318 = vmul.f32 %v287, %v317
        %v319 = vmul.f32 %v289, %v317
        %v320 = vmul.f32 %v291, %v317
        %v321 = vmul.f32 %v293, %v317
        %v322 = vlaneseq
        %v323 = vshrl.u32 %v322, 7
        %v324 = vsub.s32 0, %v323
        %v325 = vrot.slane %v318, %v324
        %v326 = vlaneseq
        %v327 = vshrl.u32 %v326, 7
        %v328 = vsub.s32 0, %v327
        %v329 = vrot.slane %v319, %v328
        %v330 = vlaneseq
        %v331 = vshrl.u32 %v330, 7
        %v332 = vsub.s32 0, %v331
        %v333 = vrot.slane %v320, %v332
        %v334 = vlaneseq
        %v335 = vshrl.u32 %v334, 7
        %v336 = vsub.s32 0, %v335
        %v337 = vrot.slane %v321, %v336
        %v338 = vmul.f32 %v325, %v169
        %v339 = vmul.f32 %v325, %v170
        %v340 = vmul.f32 %v329, %v171
        %v341 = vmul.f32 %v329, %v172
        %v342 = vmul.f32 %v333, %v173
        %v343 = vmul.f32 %v333, %v174
        %v344 = vmul.f32 %v337, %v175
        %v345 = vmul.f32 %v337, %v176
        %346 = vst [vmem:[%s163] sm:$0xff] %v338
        %347 = vst [vmem:[%s163 + $0x8] sm:$0xff] %v339
        %348 = vst [vmem:[%s163 + $0x10] sm:$0xff] %v340
        %349 = vst [vmem:[%s163 + $0x18] sm:$0xff] %v341
        %350 = vst [vmem:[%s163 + $0x20] sm:$0xff] %v342
        %351 = vst [vmem:[%s163 + $0x28] sm:$0xff] %v343
        %352 = vst [vmem:[%s163 + $0x30] sm:$0xff] %v344
        %353 = vst [vmem:[%s163 + $0x38] sm:$0xff] %v345
        %s354 = sand.u32 %s76, 1
        %s355 = scalar_lea.sflag [#allocation6], %s354
        %s356 = sand.u32 %s76, 1
        %s357 = smul.addr %s356, 64
        %s358 = scalar_lea.vmem [#allocation7], %s357
        // Predicated region
        $region33: #{tpu_custom_call.1} parent=27 // pred_check
          %p359 = pneg %p86
        $region34: #{tpu_custom_call.1} parent=27 // pred_check_branch
          %361 = sbr.rel (%p359) target = $region36
        $region35: #{tpu_custom_call.1} parent=27 // pred_region
          %s363 = ssub.s32 1024, 1024
          %364 = vsyncadd %s355, %s363
          %s365 = smul.addr %s21, 8
          %s366 = smul.addr %s365, 128
          %s367 = scalar_lea.hbm %s3, %s366
          %s368 = sshll.u32 %s358, 4
          %s369 = int_to_ptr.vmem [resolvable:$true] %s368
          %374 = dma.vmem_to_hbm [thread:$0]  %s369, 1024, %s367, %s355, 128, 128, 8
        $region36: #{tpu_custom_call.1} parent=27 // pred_fallthru
          _
      $region28: #{tpu_custom_call.1} parent=5 // pred_fallthru
        _
      %p375 = scmp.le.s32.totalorder 2, %s16
      // Predicated region
      $region37: #{tpu_custom_call.1} parent=5 // pred_check
        %p376 = pneg %p375
      $region38: #{tpu_custom_call.1} parent=5 // pred_check_branch
        %378 = sbr.rel (%p376) target = $region40
      $region39: #{tpu_custom_call.1} parent=5 // pred_region
        %s379 = ssub.s32 %s16, 2
        // Predicated region
        $region41: #{tpu_custom_call.1} parent=39 // pred_check
          %p380 = pneg %p92
        $region42: #{tpu_custom_call.1} parent=39 // pred_check_branch
          %382 = sbr.rel (%p380) target = $region44
        $region43: #{tpu_custom_call.1} parent=39 // pred_region
          %s383 = sand.u32 %s77, 1
          %s384 = scalar_lea.sflag [#allocation6], %s383
          %s385 = sand.u32 %s77, 1
          %s386 = smul.addr %s385, 64
          %s387 = scalar_lea.vmem [#allocation7], %s386
          %388 = dma.done %s384, 1024
        $region44: #{tpu_custom_call.1} parent=39 // pred_fallthru
          _
      $region40: #{tpu_custom_call.1} parent=5 // pred_fallthru
        _
    $region6: #{tpu_custom_call.1} parent=1 // loop_footer
      %s20 = sadd.s32 1, %s16
    $region7: #{tpu_custom_call.1} parent=1 // loop_footer_branch
      %15 = sbr.rel target = $region3
    $region8: #{tpu_custom_call.1} parent=1 // loop_exit
      _
    %389 = vsyncpa [#allocation5], 1
    %s390 = scalar_lea.sflag [#allocation5], 1
    %391 = vsyncpa %s390, 1
    %392 = vsyncpa [#allocation6], 1
    %s393 = scalar_lea.sflag [#allocation6], 1
    %394 = vsyncpa %s393, 1

</llo_original>
